<compile_context>
chip_gen: v7x
topology: tpu7x:2x2x1
jax: 0.10.0
libtpu: 0.0.40
codegen_flags: <defaults>
</compile_context>

<pallas_src>
import functools

import jax
import jax.numpy as jnp
from jax import lax
from jax.experimental import pallas as pl
from jax.experimental.pallas import tpu as pltpu


# ----------------------------- Pallas kernel ------------------------------- #
def resblock_kernel(xc_ref, xl_ref, xr_ref, rl_ref, rr_ref,
                    wsc_ref, bsc_ref, w1s_ref, b1_ref, w2_ref, b2_ref,
                    out_ref, *, dilation: int, tile_len: int, halo_blk: int):
    d, tl, hb = dilation, tile_len, halo_blk

    l = pl.program_id(1)
    is_first = l == 0
    is_last = l == pl.num_programs(1) - 1

    # Center window: lane-aligned block of the *unpadded* input (no slicing of
    # a padded tensor, no misaligned copy for the shortcut / center tap).
    xc = xc_ref[0]                                                  # (C, TL) f32

    # d halo columns on each side.  Interior tiles take them from the
    # neighbouring 128-column block of x; the first/last tile use the tiny
    # precomputed reflected-edge columns (in-kernel reflection handling).
    xl = jnp.where(is_first, rl_ref[0], xl_ref[0, :, hb - d:hb])    # (C, d)
    xr = jnp.where(is_last, rr_ref[0], xr_ref[0, :, 0:d])           # (C, d)

    # ---- shortcut: weight-normed Conv1d(k=1) == pointwise matmul ----
    # bf16 operands on the MXU, f32 accumulation, bias add in f32.
    sc = jnp.dot(wsc_ref[...], xc.astype(jnp.bfloat16),
                 preferred_element_type=jnp.float32) + bsc_ref[...]

    # ---- main path ----
    # LeakyReLU(0.2) in f32 on the VPU (it commutes with reflection padding,
    # which only copies elements).
    leaky = lambda t: jnp.where(t > 0, t, 0.2 * t)
    hc = leaky(xc)                                                  # (C, TL)
    hl = leaky(xl)                                                  # (C, d)
    hr = leaky(xr)                                                  # (C, d)

    # Conv1d(k=3, dilation=d) fused into ONE MXU matmul with K = 3C:
    #   rows [0,  C)  <- window shifted by -d (left halo / reflection)
    #   rows [C, 2C)  <- unshifted window
    #   rows [2C,3C)  <- window shifted by +d (right halo / reflection)
    win_m = jnp.concatenate([hl, hc[:, :tl - d]], axis=1)           # (C, TL)
    win_p = jnp.concatenate([hc[:, d:], hr], axis=1)                # (C, TL)
    stacked = jnp.concatenate([win_m, hc, win_p], axis=0)           # (3C, TL)

    acc = jnp.dot(w1s_ref[...], stacked.astype(jnp.bfloat16),
                  preferred_element_type=jnp.float32) + b1_ref[...]
    y = leaky(acc)                                                  # f32

    # Conv1d(k=1).
    main = jnp.dot(w2_ref[...], y.astype(jnp.bfloat16),
                   preferred_element_type=jnp.float32) + b2_ref[...]

    out_ref[0] = (main + sc).astype(out_ref.dtype)


# ------------------------------ tiling heuristic ---------------------------- #
def _choose_tile_len(L: int, C: int, d: int) -> int:
    """Largest multiple-of-128 divisor of L whose per-step working set fits a
    conservative (v7x 64 MiB) VMEM budget.  Falls back to the whole sequence
    when L cannot be tiled lane-aligned or the dilation halo is too wide."""
    if L % 128 != 0 or L <= 128 or d >= 128:
        return L
    # Working set per grid step is roughly 40 * C * TL bytes (dbuf I/O + f32 temps).
    budget_cols = max(128, (12 * 2 ** 20) // (40 * max(C, 8)))
    best = 128
    cand = 128
    while cand <= min(L, budget_cols):
        if L % cand == 0:
            best = cand
        cand += 128
    return best


# ------------------------------- wrapper ------------------------------------ #
@functools.partial(jax.jit, static_argnames=("dilation", "tile_len"))
def residual_block(x, params, dilation: int, tile_len=None):
    """x: (B, C, L) float32. params: (w_sc, b_sc, w1, b1, w2, b2) in f32:
         w_sc, w2: (C, C)    effective (weight-normed) k=1 conv weights
         w1:       (C, C, 3) effective k=3 conv weights (PyTorch OIH layout)
         biases:   (C,)
    """
    B, C, L = x.shape
    d = int(dilation)
    assert 1 <= d <= L - 1, "reflection pad width must be >=1 and < sequence length"
    w_sc, b_sc, w1, b1, w2, b2 = params

    # ---- L tiling (halo'd) ----
    tl = int(tile_len) if tile_len is not None else _choose_tile_len(L, C, d)
    assert L % tl == 0, "tile_len must divide L"
    assert tl % 128 == 0 or tl == L, "tile_len must be a multiple of 128 (or = L)"
    assert d < tl, "dilation halo must fit inside one tile"
    nlt = L // tl
    if nlt > 1:
        assert d <= 128, "dilation > 128 requires tile_len == L"
    # Halo block size (used to fetch the d neighbour columns of each tile).
    hb = 128 if (L % 128 == 0 and L >= 128 and d <= 128) else L
    assert tl % hb == 0 and d <= hb
    r = tl // hb          # halo blocks per tile
    nhb = L // hb         # total halo blocks along L

    # ---- kernel-ready parameters (tiny, one-time transforms) ----
    w_sc_k = w_sc.astype(jnp.bfloat16)                                       # (C, C)
    w1s_k = jnp.concatenate([w1[:, :, 0], w1[:, :, 1], w1[:, :, 2]],
                            axis=1).astype(jnp.bfloat16)                     # (C, 3C)
    w2_k = w2.astype(jnp.bfloat16)                                           # (C, C)
    b_sc_k = b_sc.reshape(C, 1).astype(jnp.float32)
    b1_k = b1.reshape(C, 1).astype(jnp.float32)
    b2_k = b2.reshape(C, 1).astype(jnp.float32)

    # Tiny (B, C, d) reflected boundary columns — replaces the full-array
    # ReflectionPad1d round trip through HBM.
    refl_l = jnp.flip(x[:, :, 1:d + 1], axis=-1)            # x[d], ..., x[1]
    refl_r = jnp.flip(x[:, :, L - 1 - d:L - 1], axis=-1)    # x[L-2], ..., x[L-1-d]

    kernel = functools.partial(resblock_kernel, dilation=d, tile_len=tl, halo_blk=hb)

    # VMEM budget: double-buffered I/O blocks + weights + in-kernel f32 temps.
    est = (2 * C * tl * 4 + 4 * C * hb * 4 + 4 * C * d * 4          # inputs (dbuf)
           + 2 * C * tl * 4                                          # output (dbuf)
           + 2 * (2 * C * C * 2 + 3 * C * C * 2 + 3 * C * 4)         # weights/biases
           + 12 * C * tl * 4)                                        # temporaries
    vmem_limit = int(min(64 * 2 ** 20, max(32 * 2 ** 20, 2 * est)))

    return pl.pallas_call(
        kernel,
        out_shape=jax.ShapeDtypeStruct((B, C, L), x.dtype),
        grid_spec=pltpu.PrefetchScalarGridSpec(
            num_scalar_prefetch=0,
            grid=(B, nlt),
            in_specs=[
                # center tile of x (lane-aligned)
                pl.BlockSpec((1, C, tl), lambda b, l: (b, 0, l)),
                # left / right halo blocks of x (clamped at the sequence ends;
                # content unused there — reflection inputs take over)
                pl.BlockSpec((1, C, hb),
                             lambda b, l: (b, 0, jnp.maximum(l * r - 1, 0))),
                pl.BlockSpec((1, C, hb),
                             lambda b, l: (b, 0, jnp.minimum((l + 1) * r, nhb - 1))),
                # reflected edge columns (tiny)
                pl.BlockSpec((1, C, d), lambda b, l: (b, 0, 0)),
                pl.BlockSpec((1, C, d), lambda b, l: (b, 0, 0)),
                # weights / biases (resident)
                pl.BlockSpec((C, C), lambda b, l: (0, 0)),        # w_sc (bf16)
                pl.BlockSpec((C, 1), lambda b, l: (0, 0)),        # b_sc (f32)
                pl.BlockSpec((C, 3 * C), lambda b, l: (0, 0)),    # w1 stacked (bf16)
                pl.BlockSpec((C, 1), lambda b, l: (0, 0)),        # b1 (f32)
                pl.BlockSpec((C, C), lambda b, l: (0, 0)),        # w2 (bf16)
                pl.BlockSpec((C, 1), lambda b, l: (0, 0)),        # b2 (f32)
            ],
            out_specs=pl.BlockSpec((1, C, tl), lambda b, l: (b, 0, l)),
        ),
        compiler_params=pltpu.CompilerParams(
            dimension_semantics=("parallel", "parallel"),
            vmem_limit_bytes=vmem_limit,
        ),
    )(x, x, x, refl_l, refl_r, w_sc_k, b_sc_k, w1s_k, b1_k, w2_k, b2_k)


# --------------------------- parameter construction ------------------------- #
def weight_norm_effective(v, g):
    """PyTorch weight_norm (dim=0): w = g * v / ||v|| with the norm over dims (1, 2)."""
    norm = jnp.sqrt(jnp.sum(v * v, axis=(1, 2), keepdims=True))
    return g.reshape(-1, 1, 1) * v / norm


def make_params(key, dim: int):
    ks = jax.random.split(key, 9)
    # shortcut: Conv1d(dim, dim, k=1)
    v_sc = jax.random.normal(ks[0], (dim, dim, 1), jnp.float32) * 0.3
    g_sc = jax.random.uniform(ks[1], (dim,), jnp.float32, 0.5, 1.5)
    b_sc = jax.random.normal(ks[2], (dim,), jnp.float32) * 0.1
    # conv1: Conv1d(dim, dim, k=3, dilation=d)
    v_1 = jax.random.normal(ks[3], (dim, dim, 3), jnp.float32) * 0.3
    g_1 = jax.random.uniform(ks[4], (dim,), jnp.float32, 0.5, 1.5)
    b_1 = jax.random.normal(ks[5], (dim,), jnp.float32) * 0.1
    # conv2: Conv1d(dim, dim, k=1)
    v_2 = jax.random.normal(ks[6], (dim, dim, 1), jnp.float32) * 0.3
    g_2 = jax.random.uniform(ks[7], (dim,), jnp.float32, 0.5, 1.5)
    b_2 = jax.random.normal(ks[8], (dim,), jnp.float32) * 0.1

    w_sc = weight_norm_effective(v_sc, g_sc)[:, :, 0]     # (C, C)
    w_1 = weight_norm_effective(v_1, g_1)                 # (C, C, 3) PyTorch OIH
    w_2 = weight_norm_effective(v_2, g_2)[:, :, 0]        # (C, C)
    return (w_sc, b_sc, w_1, b_1, w_2, b_2)


# ------------------------------ pure-JAX reference --------------------------- #
def ref_forward(x, params, dilation: int):
    w_sc, b_sc, w1, b1, w2, b2 = params
    d = dilation
    dn = ("NCH", "OIH", "NCH")

    sc = lax.conv_general_dilated(x, w_sc[:, :, None], (1,), "VALID",
                                  dimension_numbers=dn) + b_sc[None, :, None]
    h = jnp.where(x > 0, x, 0.2 * x)
    h = jnp.pad(h, ((0, 0), (0, 0), (d, d)), mode="reflect")
    y = lax.conv_general_dilated(h, w1, (1,), "VALID", rhs_dilation=(d,),
                                 dimension_numbers=dn) + b1[None, :, None]
    y = jnp.where(y > 0, y, 0.2 * y)
    main = lax.conv_general_dilated(y, w2[:, :, None], (1,), "VALID",
                                    dimension_numbers=dn) + b2[None, :, None]
    return main + sc


# ---------------------------------- main ------------------------------------ #
if __name__ == "__main__":
    key = jax.random.PRNGKey(0)

    # (B, C, L, dilation, tile_len override)
    configs = [
        (2, 8, 16, 2, None),    # tiny: single tile, in-kernel reflection both sides
        (2, 8, 512, 3, 128),    # exercises L tiling with neighbour-block halos
        (2, 8, 512, 2, 256),    # exercises tiles spanning multiple halo blocks
    ]

    for i, (B, C, L, d, tl) in enumerate(configs):
        k_x, k_p, key = jax.random.split(key, 3)
        x = jax.random.normal(k_x, (B, C, L), jnp.float32)
        params = make_params(k_p, C)

        out = jax.block_until_ready(residual_block(x, params, d, tile_len=tl))
        ref = jax.block_until_ready(ref_forward(x, params, d))

        assert out.shape == (B, C, L)
        max_err = float(jnp.max(jnp.abs(out - ref)))
        # bf16 MXU operands with f32 accumulation -> loosened tolerance vs f32 ref.
        assert jnp.allclose(out, ref, rtol=1e-1, atol=1e-1), (
            f"config {i} (B={B},C={C},L={L},d={d},TL={tl}): max abs err = {max_err}")

    print("KERNEL_OK")
</pallas_src>

<mosaic_0001>
module attributes {stable_mosaic.version = 11 : i64} {
  func.func @resblock_kernel(%arg0: i32, %arg1: i32, %arg2: memref<1x8x16xf32, #tpu.memory_space<vmem>>, %arg3: memref<1x8x16xf32, #tpu.memory_space<vmem>>, %arg4: memref<1x8x16xf32, #tpu.memory_space<vmem>>, %arg5: memref<1x8x2xf32, #tpu.memory_space<vmem>>, %arg6: memref<1x8x2xf32, #tpu.memory_space<vmem>>, %arg7: memref<8x8xbf16, #tpu.memory_space<vmem>>, %arg8: memref<8x1xf32, #tpu.memory_space<vmem>>, %arg9: memref<8x24xbf16, #tpu.memory_space<vmem>>, %arg10: memref<8x1xf32, #tpu.memory_space<vmem>>, %arg11: memref<8x8xbf16, #tpu.memory_space<vmem>>, %arg12: memref<8x1xf32, #tpu.memory_space<vmem>>, %arg13: memref<1x8x16xf32, #tpu.memory_space<vmem>>) attributes {dimension_semantics = [#tpu.dimension_semantics<parallel>, #tpu.dimension_semantics<parallel>], iteration_bounds = array<i64: 2, 1>, scalar_prefetch = 0 : i64, scratch_operands = 0 : i64, tpu.core_type = #tpu.core_type<tc>, window_params = [{transform_indices = @transform_0, window_bounds = array<i64: 1, 8, 16>}, {transform_indices = @transform_1, window_bounds = array<i64: 1, 8, 16>}, {transform_indices = @transform_2, window_bounds = array<i64: 1, 8, 16>}, {transform_indices = @transform_3, window_bounds = array<i64: 1, 8, 2>}, {transform_indices = @transform_4, window_bounds = array<i64: 1, 8, 2>}, {pipeline_mode = #tpu.pipeline_mode<synchronous>, transform_indices = @transform_5, window_bounds = array<i64: 8, 8>}, {pipeline_mode = #tpu.pipeline_mode<synchronous>, transform_indices = @transform_6, window_bounds = array<i64: 8, 1>}, {pipeline_mode = #tpu.pipeline_mode<synchronous>, transform_indices = @transform_7, window_bounds = array<i64: 8, 24>}, {pipeline_mode = #tpu.pipeline_mode<synchronous>, transform_indices = @transform_8, window_bounds = array<i64: 8, 1>}, {pipeline_mode = #tpu.pipeline_mode<synchronous>, transform_indices = @transform_9, window_bounds = array<i64: 8, 8>}, {pipeline_mode = #tpu.pipeline_mode<synchronous>, transform_indices = @transform_10, window_bounds = array<i64: 8, 1>}, {transform_indices = @transform_11, window_bounds = array<i64: 1, 8, 16>}]} {
    %c0_i32 = arith.constant 0 : i32
    %0 = arith.cmpi eq, %arg1, %c0_i32 : i32
    %c0_i32_0 = arith.constant 0 : i32
    %1 = arith.cmpi eq, %arg1, %c0_i32_0 : i32
    %c0 = arith.constant 0 : index
    %c0_1 = arith.constant 0 : index
    %c0_2 = arith.constant 0 : index
    %2 = vector.load %arg2[%c0, %c0_1, %c0_2] : memref<1x8x16xf32, #tpu.memory_space<vmem>>, vector<1x8x16xf32>
    %3 = vector.shape_cast %2 : vector<1x8x16xf32> to vector<8x16xf32>
    %c0_3 = arith.constant 0 : index
    %c0_4 = arith.constant 0 : index
    %c0_5 = arith.constant 0 : index
    %4 = vector.load %arg5[%c0_3, %c0_4, %c0_5] : memref<1x8x2xf32, #tpu.memory_space<vmem>>, vector<1x8x2xf32>
    %5 = vector.shape_cast %4 : vector<1x8x2xf32> to vector<8x2xf32>
    %c0_6 = arith.constant 0 : index
    %c0_7 = arith.constant 0 : index
    %c14 = arith.constant 14 : index
    %6 = vector.load %arg3[%c0_6, %c0_7, %c14] : memref<1x8x16xf32, #tpu.memory_space<vmem>>, vector<1x8x2xf32>
    %7 = vector.shape_cast %6 : vector<1x8x2xf32> to vector<8x2xf32>
    %8 = arith.select %0, %5, %7 : vector<8x2xf32>
    %c0_8 = arith.constant 0 : index
    %c0_9 = arith.constant 0 : index
    %c0_10 = arith.constant 0 : index
    %9 = vector.load %arg6[%c0_8, %c0_9, %c0_10] : memref<1x8x2xf32, #tpu.memory_space<vmem>>, vector<1x8x2xf32>
    %10 = vector.shape_cast %9 : vector<1x8x2xf32> to vector<8x2xf32>
    %c0_11 = arith.constant 0 : index
    %c0_12 = arith.constant 0 : index
    %c0_13 = arith.constant 0 : index
    %11 = vector.load %arg4[%c0_11, %c0_12, %c0_13] : memref<1x8x16xf32, #tpu.memory_space<vmem>>, vector<1x8x2xf32>
    %12 = vector.shape_cast %11 : vector<1x8x2xf32> to vector<8x2xf32>
    %13 = arith.select %1, %10, %12 : vector<8x2xf32>
    %c0_14 = arith.constant 0 : index
    %c0_15 = arith.constant 0 : index
    %14 = vector.load %arg7[%c0_14, %c0_15] : memref<8x8xbf16, #tpu.memory_space<vmem>>, vector<8x8xbf16>
    %15 = arith.truncf %3 : vector<8x16xf32> to vector<8x16xbf16>
    %cst = arith.constant dense<0.000000e+00> : vector<8x16xf32>
    %16 = tpu.matmul %14, %15, %cst {dimension_numbers = #tpu.dot_dimension_numbers<[1], [0], [0], [1], [0, 0, 1, 1], [], []>} : vector<8x8xbf16>, vector<8x16xbf16>, vector<8x16xf32> -> vector<8x16xf32>
    %c0_16 = arith.constant 0 : index
    %c0_17 = arith.constant 0 : index
    %17 = vector.load %arg8[%c0_16, %c0_17] : memref<8x1xf32, #tpu.memory_space<vmem>>, vector<8x1xf32>
    %18 = vector.broadcast %17 : vector<8x1xf32> to vector<8x16xf32>
    %19 = arith.addf %16, %18 : vector<8x16xf32>
    %cst_18 = arith.constant 0.000000e+00 : f32
    %20 = vector.broadcast %cst_18 : f32 to vector<8x16xf32>
    %21 = arith.cmpf ogt, %3, %20 : vector<8x16xf32>
    %cst_19 = arith.constant 2.000000e-01 : f32
    %22 = vector.broadcast %cst_19 : f32 to vector<8x16xf32>
    %23 = arith.mulf %22, %3 : vector<8x16xf32>
    %24 = arith.select %21, %3, %23 : vector<8x16xi1>, vector<8x16xf32>
    %cst_20 = arith.constant 0.000000e+00 : f32
    %25 = vector.broadcast %cst_20 : f32 to vector<8x2xf32>
    %26 = arith.cmpf ogt, %8, %25 : vector<8x2xf32>
    %cst_21 = arith.constant 2.000000e-01 : f32
    %27 = vector.broadcast %cst_21 : f32 to vector<8x2xf32>
    %28 = arith.mulf %27, %8 : vector<8x2xf32>
    %29 = arith.select %26, %8, %28 : vector<8x2xi1>, vector<8x2xf32>
    %cst_22 = arith.constant 0.000000e+00 : f32
    %30 = vector.broadcast %cst_22 : f32 to vector<8x2xf32>
    %31 = arith.cmpf ogt, %13, %30 : vector<8x2xf32>
    %cst_23 = arith.constant 2.000000e-01 : f32
    %32 = vector.broadcast %cst_23 : f32 to vector<8x2xf32>
    %33 = arith.mulf %32, %13 : vector<8x2xf32>
    %34 = arith.select %31, %13, %33 : vector<8x2xi1>, vector<8x2xf32>
    %35 = vector.extract_strided_slice %24 {offsets = [0, 0], sizes = [8, 14], strides = [1, 1]} : vector<8x16xf32> to vector<8x14xf32>
    %36 = tpu.concatenate %29, %35 in 1 : vector<8x2xf32>, vector<8x14xf32> -> vector<8x16xf32>
    %37 = vector.extract_strided_slice %24 {offsets = [0, 2], sizes = [8, 14], strides = [1, 1]} : vector<8x16xf32> to vector<8x14xf32>
    %38 = tpu.concatenate %37, %34 in 1 : vector<8x14xf32>, vector<8x2xf32> -> vector<8x16xf32>
    %39 = tpu.concatenate %36, %24, %38 in 0 : vector<8x16xf32>, vector<8x16xf32>, vector<8x16xf32> -> vector<24x16xf32>
    %c0_24 = arith.constant 0 : index
    %c0_25 = arith.constant 0 : index
    %40 = vector.load %arg9[%c0_24, %c0_25] : memref<8x24xbf16, #tpu.memory_space<vmem>>, vector<8x24xbf16>
    %41 = arith.truncf %39 : vector<24x16xf32> to vector<24x16xbf16>
    %cst_26 = arith.constant dense<0.000000e+00> : vector<8x16xf32>
    %42 = tpu.matmul %40, %41, %cst_26 {dimension_numbers = #tpu.dot_dimension_numbers<[1], [0], [0], [1], [0, 0, 1, 1], [], []>} : vector<8x24xbf16>, vector<24x16xbf16>, vector<8x16xf32> -> vector<8x16xf32>
    %c0_27 = arith.constant 0 : index
    %c0_28 = arith.constant 0 : index
    %43 = vector.load %arg10[%c0_27, %c0_28] : memref<8x1xf32, #tpu.memory_space<vmem>>, vector<8x1xf32>
    %44 = vector.broadcast %43 : vector<8x1xf32> to vector<8x16xf32>
    %45 = arith.addf %42, %44 : vector<8x16xf32>
    %cst_29 = arith.constant 0.000000e+00 : f32
    %46 = vector.broadcast %cst_29 : f32 to vector<8x16xf32>
    %47 = arith.cmpf ogt, %45, %46 : vector<8x16xf32>
    %cst_30 = arith.constant 2.000000e-01 : f32
    %48 = vector.broadcast %cst_30 : f32 to vector<8x16xf32>
    %49 = arith.mulf %48, %45 : vector<8x16xf32>
    %50 = arith.select %47, %45, %49 : vector<8x16xi1>, vector<8x16xf32>
    %c0_31 = arith.constant 0 : index
    %c0_32 = arith.constant 0 : index
    %51 = vector.load %arg11[%c0_31, %c0_32] : memref<8x8xbf16, #tpu.memory_space<vmem>>, vector<8x8xbf16>
    %52 = arith.truncf %50 : vector<8x16xf32> to vector<8x16xbf16>
    %cst_33 = arith.constant dense<0.000000e+00> : vector<8x16xf32>
    %53 = tpu.matmul %51, %52, %cst_33 {dimension_numbers = #tpu.dot_dimension_numbers<[1], [0], [0], [1], [0, 0, 1, 1], [], []>} : vector<8x8xbf16>, vector<8x16xbf16>, vector<8x16xf32> -> vector<8x16xf32>
    %c0_34 = arith.constant 0 : index
    %c0_35 = arith.constant 0 : index
    %54 = vector.load %arg12[%c0_34, %c0_35] : memref<8x1xf32, #tpu.memory_space<vmem>>, vector<8x1xf32>
    %55 = vector.broadcast %54 : vector<8x1xf32> to vector<8x16xf32>
    %56 = arith.addf %53, %55 : vector<8x16xf32>
    %57 = arith.addf %56, %19 : vector<8x16xf32>
    %c0_36 = arith.constant 0 : index
    %c0_37 = arith.constant 0 : index
    %c0_38 = arith.constant 0 : index
    %58 = vector.load %arg13[%c0_36, %c0_37, %c0_38] : memref<1x8x16xf32, #tpu.memory_space<vmem>>, vector<1x8x16xf32>
    %59 = vector.shape_cast %58 : vector<1x8x16xf32> to vector<8x16xf32>
    %60 = vector.shape_cast %57 : vector<8x16xf32> to vector<1x8x16xf32>
    tpu.vector_store %arg13[%c0_36, %c0_37, %c0_38], %60 {strides = array<i32>} : memref<1x8x16xf32, #tpu.memory_space<vmem>>, vector<1x8x16xf32>,
    return
  }
  func.func @transform_0(%arg0: i32, %arg1: i32) -> (i32, i32, i32) {
    %c0_i32 = arith.constant 0 : i32
    %c0_i32_0 = arith.constant 0 : i32
    return %arg0, %c0_i32, %arg1 : i32, i32, i32
  }
  func.func @transform_1(%arg0: i32, %arg1: i32) -> (i32, i32, i32) {
    %c1_i32 = arith.constant 1 : i32
    %0 = arith.muli %arg1, %c1_i32 : i32
    %c1_i32_0 = arith.constant 1 : i32
    %1 = arith.subi %0, %c1_i32_0 : i32
    %c0_i32 = arith.constant 0 : i32
    %2 = arith.maxsi %1, %c0_i32 : i32
    %c0_i32_1 = arith.constant 0 : i32
    %c0_i32_2 = arith.constant 0 : i32
    return %arg0, %c0_i32_1, %2 : i32, i32, i32
  }
  func.func @transform_2(%arg0: i32, %arg1: i32) -> (i32, i32, i32) {
    %c1_i32 = arith.constant 1 : i32
    %0 = arith.addi %arg1, %c1_i32 : i32
    %c1_i32_0 = arith.constant 1 : i32
    %1 = arith.muli %0, %c1_i32_0 : i32
    %c0_i32 = arith.constant 0 : i32
    %2 = arith.minsi %1, %c0_i32 : i32
    %c0_i32_1 = arith.constant 0 : i32
    %c0_i32_2 = arith.constant 0 : i32
    return %arg0, %c0_i32_1, %2 : i32, i32, i32
  }
  func.func @transform_3(%arg0: i32, %arg1: i32) -> (i32, i32, i32) {
    %c0_i32 = arith.constant 0 : i32
    %c0_i32_0 = arith.constant 0 : i32
    %c0_i32_1 = arith.constant 0 : i32
    return %arg0, %c0_i32, %c0_i32_0 : i32, i32, i32
  }
  func.func @transform_4(%arg0: i32, %arg1: i32) -> (i32, i32, i32) {
    %c0_i32 = arith.constant 0 : i32
    %c0_i32_0 = arith.constant 0 : i32
    %c0_i32_1 = arith.constant 0 : i32
    return %arg0, %c0_i32, %c0_i32_0 : i32, i32, i32
  }
  func.func @transform_5(%arg0: i32, %arg1: i32) -> (i32, i32) {
    %c0_i32 = arith.constant 0 : i32
    %c0_i32_0 = arith.constant 0 : i32
    %c0_i32_1 = arith.constant 0 : i32
    return %c0_i32, %c0_i32_0 : i32, i32
  }
  func.func @transform_6(%arg0: i32, %arg1: i32) -> (i32, i32) {
    %c0_i32 = arith.constant 0 : i32
    %c0_i32_0 = arith.constant 0 : i32
    %c0_i32_1 = arith.constant 0 : i32
    return %c0_i32, %c0_i32_0 : i32, i32
  }
  func.func @transform_7(%arg0: i32, %arg1: i32) -> (i32, i32) {
    %c0_i32 = arith.constant 0 : i32
    %c0_i32_0 = arith.constant 0 : i32
    %c0_i32_1 = arith.constant 0 : i32
    return %c0_i32, %c0_i32_0 : i32, i32
  }
  func.func @transform_8(%arg0: i32, %arg1: i32) -> (i32, i32) {
    %c0_i32 = arith.constant 0 : i32
    %c0_i32_0 = arith.constant 0 : i32
    %c0_i32_1 = arith.constant 0 : i32
    return %c0_i32, %c0_i32_0 : i32, i32
  }
  func.func @transform_9(%arg0: i32, %arg1: i32) -> (i32, i32) {
    %c0_i32 = arith.constant 0 : i32
    %c0_i32_0 = arith.constant 0 : i32
    %c0_i32_1 = arith.constant 0 : i32
    return %c0_i32, %c0_i32_0 : i32, i32
  }
  func.func @transform_10(%arg0: i32, %arg1: i32) -> (i32, i32) {
    %c0_i32 = arith.constant 0 : i32
    %c0_i32_0 = arith.constant 0 : i32
    %c0_i32_1 = arith.constant 0 : i32
    return %c0_i32, %c0_i32_0 : i32, i32
  }
  func.func @transform_11(%arg0: i32, %arg1: i32) -> (i32, i32, i32) {
    %c0_i32 = arith.constant 0 : i32
    %c0_i32_0 = arith.constant 0 : i32
    return %arg0, %c0_i32, %arg1 : i32, i32, i32
  }
}

</mosaic_0001>

<llo_original>
// kernel: residual_block.1
$region0: #{residual_block.1}
  #allocation0 [shape = 'u32[]', space=smem, size = 0x4, offset = 0x4, fixed_abs, tag = 'smem constant byte address 0x4 - core index']
  #allocation1 [shape = 'u32[144,128]{1,0:T(1,128)}', space=vmem, size = 0x12000, scoped, tag = 'internal scratch']
  %s0 = inlined_call_operand.vmem [shape: f32[2,8,16], index: 0, kind: input, shape index: {}, may-alias: {0,1,2}]
  %s1 = inlined_call_operand.vmem [shape: f32[2,8,16], index: 1, kind: input, shape index: {}, may-alias: {0,1,2}]
  %s2 = inlined_call_operand.vmem [shape: f32[2,8,16], index: 2, kind: input, shape index: {}, may-alias: {0,1,2}]
  %s3 = inlined_call_operand.vmem [shape: f32[2,8,2], index: 3, kind: input, shape index: {}]
  %s4 = inlined_call_operand.vmem [shape: f32[2,8,2], index: 4, kind: input, shape index: {}]
  %s5 = inlined_call_operand.vmem [shape: bf16[8,8], index: 5, kind: input, shape index: {}]
  %s6 = inlined_call_operand.vmem [shape: f32[8,1], index: 6, kind: input, shape index: {}]
  %s7 = inlined_call_operand.vmem [shape: bf16[8,24], index: 7, kind: input, shape index: {}]
  %s8 = inlined_call_operand.vmem [shape: f32[8,1], index: 8, kind: input, shape index: {}]
  %s9 = inlined_call_operand.vmem [shape: bf16[8,8], index: 9, kind: input, shape index: {}]
  %s10 = inlined_call_operand.vmem [shape: f32[8,1], index: 10, kind: input, shape index: {}]
  %s11 = inlined_call_operand.hbm [shape: f32[2,8,16], index: 11, kind: output, shape index: {}]
  %s12 = sld [smem:[#allocation0]]
  $region77: #{residual_block.1} parent=0
    _
  %s14 = ssub.s32 1, %s12
  %s15 = scalar_select 0, %s14, %s12
  $region1: #{residual_block.1} parent=0
    #allocation2 [shape = 'u8[8192]{0}', space=vmem, size = 0x2000, scoped, tag = 'output window, operand 0']
    #allocation3 [shape = 's32[2]{0}', space=sflag, size = 0x8, scoped, tag = 'scoped memory for residual_block.1']
    %16 = vsyncpa [#allocation3], 0
    %s17 = scalar_lea.sflag [#allocation3], 1
    %18 = vsyncpa %s17, 0
    loop: start=0, step=1, limit=4
    $region2: #{residual_block.1} parent=1 // loop_pre_header
      _
    $region3: #{residual_block.1} parent=1 // loop_header
      %s20 = sphi 0, %s24
      %p21 = scmp.ge.s32.totalorder %s20, 4
      %s27 = sphi 0, %s39
      %s28 = sphi 0, %s35
      %s29 = sphi 0, %s27
      %s30 = sphi 0, %s28
      %s31 = sphi 0, %s29
      %s32 = sphi 0, %s30
      %s44 = sphi 0, %s46
      %s47 = sphi 0, %s44
      %s48 = sphi 0, %s47
      %s64 = sphi 0, %s48
      %s78 = sphi 0, %s80
      %s81 = sphi 0, %s78
      %s82 = sphi 0, %s81
      %s98 = sphi 0, %s82
      %s112 = sphi 0, %s114
      %s115 = sphi 0, %s112
      %s116 = sphi 0, %s115
      %s132 = sphi 0, %s116
      %s138 = sphi 0, %s140
      %s141 = sphi 0, %s138
      %s142 = sphi 0, %s141
      %s158 = sphi 0, %s142
      %s164 = sphi 0, %s166
      %s167 = sphi 0, %s164
      %s168 = sphi 0, %s167
      %s184 = sphi 0, %s168
      %s188 = sphi 0, %s188
      %s190 = sphi 0, %s188
      %s191 = sphi 0, %s190
      %s205 = sphi 0, %s191
      %s209 = sphi 0, %s209
      %s211 = sphi 0, %s209
      %s212 = sphi 0, %s211
      %s226 = sphi 0, %s212
      %s230 = sphi 0, %s230
      %s232 = sphi 0, %s230
      %s233 = sphi 0, %s232
      %s247 = sphi 0, %s233
      %s251 = sphi 0, %s251
      %s253 = sphi 0, %s251
      %s254 = sphi 0, %s253
      %s268 = sphi 0, %s254
      %s272 = sphi 0, %s272
      %s274 = sphi 0, %s272
      %s275 = sphi 0, %s274
      %s289 = sphi 0, %s275
      %s293 = sphi 0, %s293
      %s295 = sphi 0, %s293
      %s296 = sphi 0, %s295
      %s310 = sphi 0, %s296
      %s318 = sphi 0, %s320
      %s321 = sphi 0, %s318
      %s322 = sphi 0, %s321
      %s338 = sphi 0, %s322
    $region4: #{residual_block.1} parent=1 // loop_header_branch
      %23 = sbr.rel (%p21) target = $region8
    $region5: #{residual_block.1} parent=1 // loop_body
      %s25 = ssub.s32 %s20, 1
      %s26 = ssub.s32 %s20, 2
      %s33 = sadd.s32 1, %s28
      %p34 = scmp.ge.s32.totalorder %s33, 1
      %s35 = scalar_select %p34, 0, %s33
      %s36 = sadd.s32 1, %s27
      %s37 = scalar_select %p34, %s36, %s27
      %p38 = scmp.ge.s32.totalorder %s37, 2
      %s39 = scalar_select %p38, 0, %s37
      %s40 = ssub.s32 %s27, %s39
      %s41 = ssub.s32 %s28, %s35
      %s42 = sor.u32 %s40, %s41
      %p43 = scmp.eq.s32.totalorder %s42, 0
      %s45 = sadd.s32 %s44, 1
      %s46 = scalar_select %p43, %s44, %s45
      %p49 = pneg %p43
      %p50 = scmp.eq.s32.totalorder %s20, 1
      %p51 = por %p49, %p50
      %p52 = scmp.ne.s32.totalorder %s44, %s47
      %p53 = scmp.eq.s32.totalorder %s20, 0
      %p54 = por %p52, %p53
      %p55 = scmp.ne.s32.totalorder %s44, %s47
      %p56 = scmp.eq.s32.totalorder %s25, 1
      %p57 = por %p55, %p56
      %p58 = scmp.ne.s32.totalorder %s47, %s48
      %p59 = scmp.eq.s32.totalorder %s25, 0
      %p60 = por %p58, %p59
      %p61 = scmp.ne.s32.totalorder %s47, %s48
      %p62 = scmp.eq.s32.totalorder %s26, 1
      %p63 = por %p61, %p62
      %p65 = scmp.ne.s32.totalorder %s48, %s64
      %p66 = scmp.eq.s32.totalorder %s26, 0
      %p67 = por %p65, %p66
      %s68 = ssub.s32 %s28, 1
      %p69 = scmp.gt.s32.totalorder %s68, 0
      %s70 = scalar_select %p69, %s68, 0
      %s71 = ssub.s32 %s35, 1
      %p72 = scmp.gt.s32.totalorder %s71, 0
      %s73 = scalar_select %p72, %s71, 0
      %s74 = ssub.s32 %s27, %s39
      %s75 = ssub.s32 %s70, %s73
      %s76 = sor.u32 %s74, %s75
      %p77 = scmp.eq.s32.totalorder %s76, 0
      %s79 = sadd.s32 %s78, 1
      %s80 = scalar_select %p77, %s78, %s79
      %p83 = pneg %p77
      %p84 = scmp.eq.s32.totalorder %s20, 1
      %p85 = por %p83, %p84
      %p86 = scmp.ne.s32.totalorder %s78, %s81
      %p87 = scmp.eq.s32.totalorder %s20, 0
      %p88 = por %p86, %p87
      %p89 = scmp.ne.s32.totalorder %s78, %s81
      %p90 = scmp.eq.s32.totalorder %s25, 1
      %p91 = por %p89, %p90
      %p92 = scmp.ne.s32.totalorder %s81, %s82
      %p93 = scmp.eq.s32.totalorder %s25, 0
      %p94 = por %p92, %p93
      %p95 = scmp.ne.s32.totalorder %s81, %s82
      %p96 = scmp.eq.s32.totalorder %s26, 1
      %p97 = por %p95, %p96
      %p99 = scmp.ne.s32.totalorder %s82, %s98
      %p100 = scmp.eq.s32.totalorder %s26, 0
      %p101 = por %p99, %p100
      %s102 = sadd.s32 %s28, 1
      %p103 = scmp.lt.s32.totalorder %s102, 0
      %s104 = scalar_select %p103, %s102, 0
      %s105 = sadd.s32 %s35, 1
      %p106 = scmp.lt.s32.totalorder %s105, 0
      %s107 = scalar_select %p106, %s105, 0
      %s108 = ssub.s32 %s27, %s39
      %s109 = ssub.s32 %s104, %s107
      %s110 = sor.u32 %s108, %s109
      %p111 = scmp.eq.s32.totalorder %s110, 0
      %s113 = sadd.s32 %s112, 1
      %s114 = scalar_select %p111, %s112, %s113
      %p117 = pneg %p111
      %p118 = scmp.eq.s32.totalorder %s20, 1
      %p119 = por %p117, %p118
      %p120 = scmp.ne.s32.totalorder %s112, %s115
      %p121 = scmp.eq.s32.totalorder %s20, 0
      %p122 = por %p120, %p121
      %p123 = scmp.ne.s32.totalorder %s112, %s115
      %p124 = scmp.eq.s32.totalorder %s25, 1
      %p125 = por %p123, %p124
      %p126 = scmp.ne.s32.totalorder %s115, %s116
      %p127 = scmp.eq.s32.totalorder %s25, 0
      %p128 = por %p126, %p127
      %p129 = scmp.ne.s32.totalorder %s115, %s116
      %p130 = scmp.eq.s32.totalorder %s26, 1
      %p131 = por %p129, %p130
      %p133 = scmp.ne.s32.totalorder %s116, %s132
      %p134 = scmp.eq.s32.totalorder %s26, 0
      %p135 = por %p133, %p134
      %s136 = ssub.s32 %s27, %s39
      %p137 = scmp.eq.s32.totalorder %s136, 0
      %s139 = sadd.s32 %s138, 1
      %s140 = scalar_select %p137, %s138, %s139
      %p143 = pneg %p137
      %p144 = scmp.eq.s32.totalorder %s20, 1
      %p145 = por %p143, %p144
      %p146 = scmp.ne.s32.totalorder %s138, %s141
      %p147 = scmp.eq.s32.totalorder %s20, 0
      %p148 = por %p146, %p147
      %p149 = scmp.ne.s32.totalorder %s138, %s141
      %p150 = scmp.eq.s32.totalorder %s25, 1
      %p151 = por %p149, %p150
      %p152 = scmp.ne.s32.totalorder %s141, %s142
      %p153 = scmp.eq.s32.totalorder %s25, 0
      %p154 = por %p152, %p153
      %p155 = scmp.ne.s32.totalorder %s141, %s142
      %p156 = scmp.eq.s32.totalorder %s26, 1
      %p157 = por %p155, %p156
      %p159 = scmp.ne.s32.totalorder %s142, %s158
      %p160 = scmp.eq.s32.totalorder %s26, 0
      %p161 = por %p159, %p160
      %s162 = ssub.s32 %s27, %s39
      %p163 = scmp.eq.s32.totalorder %s162, 0
      %s165 = sadd.s32 %s164, 1
      %s166 = scalar_select %p163, %s164, %s165
      %p169 = pneg %p163
      %p170 = scmp.eq.s32.totalorder %s20, 1
      %p171 = por %p169, %p170
      %p172 = scmp.ne.s32.totalorder %s164, %s167
      %p173 = scmp.eq.s32.totalorder %s20, 0
      %p174 = por %p172, %p173
      %p175 = scmp.ne.s32.totalorder %s164, %s167
      %p176 = scmp.eq.s32.totalorder %s25, 1
      %p177 = por %p175, %p176
      %p178 = scmp.ne.s32.totalorder %s167, %s168
      %p179 = scmp.eq.s32.totalorder %s25, 0
      %p180 = por %p178, %p179
      %p181 = scmp.ne.s32.totalorder %s167, %s168
      %p182 = scmp.eq.s32.totalorder %s26, 1
      %p183 = por %p181, %p182
      %p185 = scmp.ne.s32.totalorder %s168, %s184
      %p186 = scmp.eq.s32.totalorder %s26, 0
      %p187 = por %p185, %p186
      %s189 = sadd.s32 %s188, 1
      %p192 = scmp.eq.s32.totalorder %s20, 1
      %p193 = scmp.ne.s32.totalorder %s188, %s190
      %p194 = scmp.eq.s32.totalorder %s20, 0
      %p195 = por %p193, %p194
      %p196 = scmp.ne.s32.totalorder %s188, %s190
      %p197 = scmp.eq.s32.totalorder %s25, 1
      %p198 = por %p196, %p197
      %p199 = scmp.ne.s32.totalorder %s190, %s191
      %p200 = scmp.eq.s32.totalorder %s25, 0
      %p201 = por %p199, %p200
      %p202 = scmp.ne.s32.totalorder %s190, %s191
      %p203 = scmp.eq.s32.totalorder %s26, 1
      %p204 = por %p202, %p203
      %p206 = scmp.ne.s32.totalorder %s191, %s205
      %p207 = scmp.eq.s32.totalorder %s26, 0
      %p208 = por %p206, %p207
      %s210 = sadd.s32 %s209, 1
      %p213 = scmp.eq.s32.totalorder %s20, 1
      %p214 = scmp.ne.s32.totalorder %s209, %s211
      %p215 = scmp.eq.s32.totalorder %s20, 0
      %p216 = por %p214, %p215
      %p217 = scmp.ne.s32.totalorder %s209, %s211
      %p218 = scmp.eq.s32.totalorder %s25, 1
      %p219 = por %p217, %p218
      %p220 = scmp.ne.s32.totalorder %s211, %s212
      %p221 = scmp.eq.s32.totalorder %s25, 0
      %p222 = por %p220, %p221
      %p223 = scmp.ne.s32.totalorder %s211, %s212
      %p224 = scmp.eq.s32.totalorder %s26, 1
      %p225 = por %p223, %p224
      %p227 = scmp.ne.s32.totalorder %s212, %s226
      %p228 = scmp.eq.s32.totalorder %s26, 0
      %p229 = por %p227, %p228
      %s231 = sadd.s32 %s230, 1
      %p234 = scmp.eq.s32.totalorder %s20, 1
      %p235 = scmp.ne.s32.totalorder %s230, %s232
      %p236 = scmp.eq.s32.totalorder %s20, 0
      %p237 = por %p235, %p236
      %p238 = scmp.ne.s32.totalorder %s230, %s232
      %p239 = scmp.eq.s32.totalorder %s25, 1
      %p240 = por %p238, %p239
      %p241 = scmp.ne.s32.totalorder %s232, %s233
      %p242 = scmp.eq.s32.totalorder %s25, 0
      %p243 = por %p241, %p242
      %p244 = scmp.ne.s32.totalorder %s232, %s233
      %p245 = scmp.eq.s32.totalorder %s26, 1
      %p246 = por %p244, %p245
      %p248 = scmp.ne.s32.totalorder %s233, %s247
      %p249 = scmp.eq.s32.totalorder %s26, 0
      %p250 = por %p248, %p249
      %s252 = sadd.s32 %s251, 1
      %p255 = scmp.eq.s32.totalorder %s20, 1
      %p256 = scmp.ne.s32.totalorder %s251, %s253
      %p257 = scmp.eq.s32.totalorder %s20, 0
      %p258 = por %p256, %p257
      %p259 = scmp.ne.s32.totalorder %s251, %s253
      %p260 = scmp.eq.s32.totalorder %s25, 1
      %p261 = por %p259, %p260
      %p262 = scmp.ne.s32.totalorder %s253, %s254
      %p263 = scmp.eq.s32.totalorder %s25, 0
      %p264 = por %p262, %p263
      %p265 = scmp.ne.s32.totalorder %s253, %s254
      %p266 = scmp.eq.s32.totalorder %s26, 1
      %p267 = por %p265, %p266
      %p269 = scmp.ne.s32.totalorder %s254, %s268
      %p270 = scmp.eq.s32.totalorder %s26, 0
      %p271 = por %p269, %p270
      %s273 = sadd.s32 %s272, 1
      %p276 = scmp.eq.s32.totalorder %s20, 1
      %p277 = scmp.ne.s32.totalorder %s272, %s274
      %p278 = scmp.eq.s32.totalorder %s20, 0
      %p279 = por %p277, %p278
      %p280 = scmp.ne.s32.totalorder %s272, %s274
      %p281 = scmp.eq.s32.totalorder %s25, 1
      %p282 = por %p280, %p281
      %p283 = scmp.ne.s32.totalorder %s274, %s275
      %p284 = scmp.eq.s32.totalorder %s25, 0
      %p285 = por %p283, %p284
      %p286 = scmp.ne.s32.totalorder %s274, %s275
      %p287 = scmp.eq.s32.totalorder %s26, 1
      %p288 = por %p286, %p287
      %p290 = scmp.ne.s32.totalorder %s275, %s289
      %p291 = scmp.eq.s32.totalorder %s26, 0
      %p292 = por %p290, %p291
      %s294 = sadd.s32 %s293, 1
      %p297 = scmp.eq.s32.totalorder %s20, 1
      %p298 = scmp.ne.s32.totalorder %s293, %s295
      %p299 = scmp.eq.s32.totalorder %s20, 0
      %p300 = por %p298, %p299
      %p301 = scmp.ne.s32.totalorder %s293, %s295
      %p302 = scmp.eq.s32.totalorder %s25, 1
      %p303 = por %p301, %p302
      %p304 = scmp.ne.s32.totalorder %s295, %s296
      %p305 = scmp.eq.s32.totalorder %s25, 0
      %p306 = por %p304, %p305
      %p307 = scmp.ne.s32.totalorder %s295, %s296
      %p308 = scmp.eq.s32.totalorder %s26, 1
      %p309 = por %p307, %p308
      %p311 = scmp.ne.s32.totalorder %s296, %s310
      %p312 = scmp.eq.s32.totalorder %s26, 0
      %p313 = por %p311, %p312
      %s314 = ssub.s32 %s27, %s39
      %s315 = ssub.s32 %s28, %s35
      %s316 = sor.u32 %s314, %s315
      %p317 = scmp.eq.s32.totalorder %s316, 0
      %s319 = sadd.s32 %s318, 1
      %s320 = scalar_select %p317, %s318, %s319
      %p323 = pneg %p317
      %p324 = scmp.eq.s32.totalorder %s20, 1
      %p325 = por %p323, %p324
      %p326 = scmp.ne.s32.totalorder %s318, %s321
      %p327 = scmp.eq.s32.totalorder %s20, 0
      %p328 = por %p326, %p327
      %p329 = scmp.ne.s32.totalorder %s318, %s321
      %p330 = scmp.eq.s32.totalorder %s25, 1
      %p331 = por %p329, %p330
      %p332 = scmp.ne.s32.totalorder %s321, %s322
      %p333 = scmp.eq.s32.totalorder %s25, 0
      %p334 = por %p332, %p333
      %p335 = scmp.ne.s32.totalorder %s321, %s322
      %p336 = scmp.eq.s32.totalorder %s26, 1
      %p337 = por %p335, %p336
      %p339 = scmp.ne.s32.totalorder %s322, %s338
      %p340 = scmp.eq.s32.totalorder %s26, 0
      %p341 = por %p339, %p340
      %p342 = scmp.le.s32.totalorder 1, %s20
      %p343 = scmp.lt.s32.totalorder %s20, 3
      %p344 = pnand %p342, %p343
      %p345 = pneg %p344
      // Predicated region
      $region9: #{residual_block.1} parent=5 // pred_check
        _
      $region10: #{residual_block.1} parent=5 // pred_check_branch
        %347 = sbr.rel (%p344) target = $region12
      $region11: #{residual_block.1} parent=5 // pred_region
        %s348 = ssub.s32 %s20, 1
        // Predicated region
        $region13: #{residual_block.1} parent=11 // pred_check
          %p349 = pneg %p201
        $region14: #{residual_block.1} parent=11 // pred_check_branch
          %351 = sbr.rel (%p349) target = $region16
        $region15: #{residual_block.1} parent=11 // pred_region
          _
        $region16: #{residual_block.1} parent=11 // pred_fallthru
          _
        // Predicated region
        $region17: #{residual_block.1} parent=11 // pred_check
          %p352 = pneg %p222
        $region18: #{residual_block.1} parent=11 // pred_check_branch
          %354 = sbr.rel (%p352) target = $region20
        $region19: #{residual_block.1} parent=11 // pred_region
          _
        $region20: #{residual_block.1} parent=11 // pred_fallthru
          _
        // Predicated region
        $region21: #{residual_block.1} parent=11 // pred_check
          %p355 = pneg %p243
        $region22: #{residual_block.1} parent=11 // pred_check_branch
          %357 = sbr.rel (%p355) target = $region24
        $region23: #{residual_block.1} parent=11 // pred_region
          _
        $region24: #{residual_block.1} parent=11 // pred_fallthru
          _
        // Predicated region
        $region25: #{residual_block.1} parent=11 // pred_check
          %p358 = pneg %p264
        $region26: #{residual_block.1} parent=11 // pred_check_branch
          %360 = sbr.rel (%p358) target = $region28
        $region27: #{residual_block.1} parent=11 // pred_region
          _
        $region28: #{residual_block.1} parent=11 // pred_fallthru
          _
        // Predicated region
        $region29: #{residual_block.1} parent=11 // pred_check
          %p361 = pneg %p285
        $region30: #{residual_block.1} parent=11 // pred_check_branch
          %363 = sbr.rel (%p361) target = $region32
        $region31: #{residual_block.1} parent=11 // pred_region
          _
        $region32: #{residual_block.1} parent=11 // pred_fallthru
          _
        // Predicated region
        $region33: #{residual_block.1} parent=11 // pred_check
          %p364 = pneg %p306
        $region34: #{residual_block.1} parent=11 // pred_check_branch
          %366 = sbr.rel (%p364) target = $region36
        $region35: #{residual_block.1} parent=11 // pred_region
          _
        $region36: #{residual_block.1} parent=11 // pred_fallthru
          _
      $region12: #{residual_block.1} parent=5 // pred_fallthru
        _
      %p367 = scmp.lt.s32.totalorder %s20, 2
      // Predicated region
      $region37: #{residual_block.1} parent=5 // pred_check
        %p368 = pneg %p367
      $region38: #{residual_block.1} parent=5 // pred_check_branch
        %370 = sbr.rel (%p368) target = $region40
      $region39: #{residual_block.1} parent=5 // pred_region
        // Predicated region
        $region41: #{residual_block.1} parent=39 // pred_check
          %p371 = pneg %p54
        $region42: #{residual_block.1} parent=39 // pred_check_branch
          %373 = sbr.rel (%p371) target = $region44
        $region43: #{residual_block.1} parent=39 // pred_region
          %p374 = scmp.lt.s32.totalorder %s27, 1
          %s375 = scalar_select %p374, %s27, 1
          %p376 = scmp.lt.s32.totalorder %s28, 0
          %s377 = scalar_select %p376, %s28, 0
          %s378 = sadd.s32 %s377, %s375
          %s379 = smul.addr %s378, 8
          %s380 = scalar_lea.vmem %s0, %s379
        $region44: #{residual_block.1} parent=39 // pred_fallthru
          _
        // Predicated region
        $region45: #{residual_block.1} parent=39 // pred_check
          %p381 = pneg %p88
        $region46: #{residual_block.1} parent=39 // pred_check_branch
          %383 = sbr.rel (%p381) target = $region48
        $region47: #{residual_block.1} parent=39 // pred_region
          %s384 = ssub.s32 %s28, 1
          %p385 = scmp.gt.s32.totalorder %s384, 0
          %s386 = scalar_select %p385, %s384, 0
          %p387 = scmp.lt.s32.totalorder %s27, 1
          %s388 = scalar_select %p387, %s27, 1
          %p389 = scmp.lt.s32.totalorder %s386, 0
          %s390 = scalar_select %p389, %s386, 0
          %s391 = sadd.s32 %s390, %s388
          %s392 = smul.addr %s391, 8
          %s393 = scalar_lea.vmem %s1, %s392
          %s394 = ssub.s32 %s28, 1
          %p395 = scmp.gt.s32.totalorder %s394, 0
          %s396 = scalar_select %p395, %s394, 0
        $region48: #{residual_block.1} parent=39 // pred_fallthru
          _
        // Predicated region
        $region49: #{residual_block.1} parent=39 // pred_check
          %p397 = pneg %p122
        $region50: #{residual_block.1} parent=39 // pred_check_branch
          %399 = sbr.rel (%p397) target = $region52
        $region51: #{residual_block.1} parent=39 // pred_region
          %s400 = sadd.s32 %s28, 1
          %p401 = scmp.lt.s32.totalorder %s400, 0
          %s402 = scalar_select %p401, %s400, 0
          %p403 = scmp.lt.s32.totalorder %s27, 1
          %s404 = scalar_select %p403, %s27, 1
          %p405 = scmp.lt.s32.totalorder %s402, 0
          %s406 = scalar_select %p405, %s402, 0
          %s407 = sadd.s32 %s406, %s404
          %s408 = smul.addr %s407, 8
          %s409 = scalar_lea.vmem %s2, %s408
          %s410 = sadd.s32 %s28, 1
          %p411 = scmp.lt.s32.totalorder %s410, 0
          %s412 = scalar_select %p411, %s410, 0
        $region52: #{residual_block.1} parent=39 // pred_fallthru
          _
        // Predicated region
        $region53: #{residual_block.1} parent=39 // pred_check
          %p413 = pneg %p148
        $region54: #{residual_block.1} parent=39 // pred_check_branch
          %415 = sbr.rel (%p413) target = $region56
        $region55: #{residual_block.1} parent=39 // pred_region
          %p416 = scmp.lt.s32.totalorder %s27, 1
          %s417 = scalar_select %p416, %s27, 1
          %s418 = smul.addr %s417, 8
          %s419 = scalar_lea.vmem %s3, %s418
        $region56: #{residual_block.1} parent=39 // pred_fallthru
          _
        // Predicated region
        $region57: #{residual_block.1} parent=39 // pred_check
          %p420 = pneg %p174
        $region58: #{residual_block.1} parent=39 // pred_check_branch
          %422 = sbr.rel (%p420) target = $region60
        $region59: #{residual_block.1} parent=39 // pred_region
          %p423 = scmp.lt.s32.totalorder %s27, 1
          %s424 = scalar_select %p423, %s27, 1
          %s425 = smul.addr %s424, 8
          %s426 = scalar_lea.vmem %s4, %s425
        $region60: #{residual_block.1} parent=39 // pred_fallthru
          _
      $region40: #{residual_block.1} parent=5 // pred_fallthru
        _
      %p427 = scmp.le.s32.totalorder 1, %s20
      %p428 = scmp.lt.s32.totalorder %s20, 3
      %p429 = pnand %p427, %p428
      %p430 = pneg %p429
      // Predicated region
      $region61: #{residual_block.1} parent=5 // pred_check
        _
      $region62: #{residual_block.1} parent=5 // pred_check_branch
        %432 = sbr.rel (%p429) target = $region64
      $region63: #{residual_block.1} parent=5 // pred_region
        %s433 = ssub.s32 %s20, 1
        %p434 = scmp.lt.s32.totalorder %s29, 1
        %s435 = scalar_select %p434, %s29, 1
        %p436 = scmp.lt.s32.totalorder %s30, 0
        %s437 = scalar_select %p436, %s30, 0
        %s438 = sadd.s32 %s437, %s435
        %s439 = smul.addr %s438, 8
        %s440 = scalar_lea.vmem %s0, %s439
        %p441 = pneg %p60
        %p442 = pneg %p57
        %s443 = ssub.s32 %s30, 1
        %p444 = scmp.gt.s32.totalorder %s443, 0
        %s445 = scalar_select %p444, %s443, 0
        %p446 = scmp.lt.s32.totalorder %s29, 1
        %s447 = scalar_select %p446, %s29, 1
        %p448 = scmp.lt.s32.totalorder %s445, 0
        %s449 = scalar_select %p448, %s445, 0
        %s450 = sadd.s32 %s449, %s447
        %s451 = smul.addr %s450, 8
        %s452 = scalar_lea.vmem %s1, %s451
        %p453 = pneg %p94
        %p454 = pneg %p91
        %s455 = sadd.s32 %s30, 1
        %p456 = scmp.lt.s32.totalorder %s455, 0
        %s457 = scalar_select %p456, %s455, 0
        %p458 = scmp.lt.s32.totalorder %s29, 1
        %s459 = scalar_select %p458, %s29, 1
        %p460 = scmp.lt.s32.totalorder %s457, 0
        %s461 = scalar_select %p460, %s457, 0
        %s462 = sadd.s32 %s461, %s459
        %s463 = smul.addr %s462, 8
        %s464 = scalar_lea.vmem %s2, %s463
        %p465 = pneg %p128
        %p466 = pneg %p125
        %p467 = scmp.lt.s32.totalorder %s29, 1
        %s468 = scalar_select %p467, %s29, 1
        %s469 = smul.addr %s468, 8
        %s470 = scalar_lea.vmem %s3, %s469
        %p471 = pneg %p154
        %p472 = pneg %p151
        %p473 = scmp.lt.s32.totalorder %s29, 1
        %s474 = scalar_select %p473, %s29, 1
        %s475 = smul.addr %s474, 8
        %s476 = scalar_lea.vmem %s4, %s475
        %p477 = pneg %p180
        %p478 = pneg %p177
        %p479 = pneg %p201
        %p480 = pneg %p198
        %p481 = pneg %p222
        %p482 = pneg %p219
        %p483 = pneg %p243
        %p484 = pneg %p240
        %p485 = pneg %p264
        %p486 = pneg %p261
        %p487 = pneg %p285
        %p488 = pneg %p282
        %p489 = pneg %p306
        %p490 = pneg %p303
        %p491 = pneg %p334
        %p492 = pneg %p331
        %s493 = sand.u32 %s321, 1
        %s494 = scalar_lea.sflag [#allocation3], %s493
        %s495 = sand.u32 %s321, 1
        %s496 = smul.addr %s495, 8
        %s497 = scalar_lea.vmem [#allocation2], %s496
        %p498 = scmp.lt.s32.totalorder %s29, 1
        %s499 = scalar_select %p498, %s29, 1
        %p500 = scmp.lt.s32.totalorder %s30, 0
        %s501 = scalar_select %p500, %s30, 0
        %s502 = sadd.s32 %s501, %s499
        %s503 = smul.addr %s502, 8
        %s504 = scalar_lea.vmem %s0, %s503
        %s505 = ssub.s32 %s30, 1
        %p506 = scmp.gt.s32.totalorder %s505, 0
        %s507 = scalar_select %p506, %s505, 0
        %p508 = scmp.lt.s32.totalorder %s29, 1
        %s509 = scalar_select %p508, %s29, 1
        %p510 = scmp.lt.s32.totalorder %s507, 0
        %s511 = scalar_select %p510, %s507, 0
        %s512 = sadd.s32 %s511, %s509
        %s513 = smul.addr %s512, 8
        %s514 = scalar_lea.vmem %s1, %s513
        %s515 = ssub.s32 %s30, 1
        %p516 = scmp.gt.s32.totalorder %s515, 0
        %s517 = scalar_select %p516, %s515, 0
        %s518 = sadd.s32 %s30, 1
        %p519 = scmp.lt.s32.totalorder %s518, 0
        %s520 = scalar_select %p519, %s518, 0
        %p521 = scmp.lt.s32.totalorder %s29, 1
        %s522 = scalar_select %p521, %s29, 1
        %p523 = scmp.lt.s32.totalorder %s520, 0
        %s524 = scalar_select %p523, %s520, 0
        %s525 = sadd.s32 %s524, %s522
        %s526 = smul.addr %s525, 8
        %s527 = scalar_lea.vmem %s2, %s526
        %s528 = sadd.s32 %s30, 1
        %p529 = scmp.lt.s32.totalorder %s528, 0
        %s530 = scalar_select %p529, %s528, 0
        %p531 = scmp.lt.s32.totalorder %s29, 1
        %s532 = scalar_select %p531, %s29, 1
        %s533 = smul.addr %s532, 8
        %s534 = scalar_lea.vmem %s3, %s533
        %p535 = scmp.lt.s32.totalorder %s29, 1
        %s536 = scalar_select %p535, %s29, 1
        %s537 = smul.addr %s536, 8
        %s538 = scalar_lea.vmem %s4, %s537
        %p540 = scmp.eq.s32.totalorder %s30, 0
        %v541 = vld [vmem:[%s504] sm:$0xff]
        %v542 = vld [vmem:[%s534] sm:$0xff]
        %v543 = vld [vmem:[%s514] sm:$0xff]
        %s544 = scalar_select %p540, 1, 0
        %v545 = vstv %s544
        %vm546 = vcmp.eq.s32.totalorder %v545, 1
        %548 = vrot.lane.b32.xlu0 %v543, 114
        %v549 = vpop.permute.xlu0 %548
        %v551 = vsel %vm546, %v542, %v549
        %v552 = vld [vmem:[%s538] sm:$0xff]
        %v553 = vld [vmem:[%s527] sm:$0xff]
        %v554 = vsel %vm546, %v552, %v553
        %v555 = vld [vmem:[%s5] sm:$0xf]
        %v556 = vpack.c.bf16 %v541, %v541
        %v557 = vld [vmem:[%s6] sm:$0xff]
        %559 = vset.pattern.permute.xlu0 0
        %560 = vperm.xlu0 %559, %v557
        %v561 = vpop.permute.xlu0 %560
        %vm563 = vcmask 64512
        %v565 = vsel %vm563, %v555, 0
        %vm567 = vcmask 1043456
        %v569 = vsel %vm567, %v556, 0
        %571 = vmatprep.subr.bf16.mxu0 0
        %572 = vmatpush1.bf16.msra.mxu0 %v569
        %573 = vmatprep.subr.bf16.mxu0 0
        %574 = vmatpush1.bf16.msra.mxu0 0
        %575 = vmatprep.subr.bf16.mxu0 0
        %576 = vmatpush1.bf16.msra.mxu0 0
        %577 = vmatprep.subr.bf16.mxu0 0
        %578 = vmatpush1.bf16.msra.mxu0 0
        %579 = vmatprep.subr.bf16.mxu0 0
        %580 = vmatpush1.bf16.msra.mxu0 0
        %581 = vmatprep.subr.bf16.mxu0 0
        %582 = vmatpush1.bf16.msra.mxu0 0
        %583 = vmatprep.subr.bf16.mxu0 0
        %584 = vmatpush1.bf16.msra.mxu0 0
        %585 = vmatprep.subr.bf16.mxu0 0
        %586 = vmatpush1.bf16.msra.mxu0 0
        %587 = vmatprep.subr.bf16.mxu0 0
        %588 = vmatpush1.bf16.msra.mxu0 0
        %589 = vmatprep.subr.bf16.mxu0 0
        %590 = vmatpush1.bf16.msra.mxu0 0
        %591 = vmatprep.subr.bf16.mxu0 0
        %592 = vmatpush1.bf16.msra.mxu0 0
        %593 = vmatprep.subr.bf16.mxu0 0
        %594 = vmatpush1.bf16.msra.mxu0 0
        %595 = vmatprep.subr.bf16.mxu0 0
        %596 = vmatpush1.bf16.msra.mxu0 0
        %597 = vmatprep.subr.bf16.mxu0 0
        %598 = vmatpush1.bf16.msra.mxu0 0
        %599 = vmatprep.subr.bf16.mxu0 0
        %600 = vmatpush1.bf16.msra.mxu0 0
        %601 = vmatprep.subr.bf16.mxu0 0
        %602 = vmatpush1.bf16.msra.mxu0 0
        %603 = vmatprep.mubr.bf16.mxu0 0
        %604 = vmatmul.mubr.bf16.gmra.mrb[0].mxu0 %v565
        %v605 = vpop.f32.mrb[0].mxu0
        %v606 = vadd.f32 %v561, %v605
        %v607 = vpop.f32.mrb[0].mxu0
        %v608 = vpop.f32.mrb[0].mxu0
        %v609 = vpop.f32.mrb[0].mxu0
        %610 = vdwg.mxu0
        %vm611 = vcmp.gt.f32.partialorder %v541, 0.0
        %v612 = vmul.f32 %v541, 0.2
        %v613 = vsel %vm611, %v541, %v612
        %vm614 = vcmp.gt.f32.partialorder %v551, 0.0
        %v615 = vmul.f32 %v551, 0.2
        %v616 = vsel %vm614, %v551, %v615
        %vm617 = vcmp.gt.f32.partialorder %v554, 0.0
        %v618 = vmul.f32 %v554, 0.2
        %v619 = vsel %vm617, %v554, %v618
        %621 = vrot.lane.b32.xlu0 %v613, 2
        %v622 = vpop.permute.xlu0 %621
        %vm624 = vcmask 15360
        %v625 = vsel %vm624, %v616, %v622
        %626 = vrot.lane.b32.xlu0 %v613, 126
        %v627 = vpop.permute.xlu0 %626
        %630 = vrot.lane.b32.xlu0 %v619, 14
        %v631 = vpop.permute.xlu0 %630
        %vm633 = vcmask 113664
        %v634 = vsel %vm633, %v627, %v631
        %v635 = vld [vmem:[%s7] sm:$0xf]
        %v636 = vpack.c.bf16 %v613, %v625
        %v637 = vpack.c.bf16 %v634, %v634
        %v638 = vld [vmem:[%s8] sm:$0xff]
        %640 = vset.pattern.permute.xlu0 0
        %641 = vperm.xlu0 %640, %v638
        %v642 = vpop.permute.xlu0 %641
        %vm644 = vcmask 195584
        %v646 = vsel %vm644, %v635, 0
        %v649 = vsel %vm567, %v637, 0
        %651 = vmatprep.subr.bf16.mxu0 0
        %652 = vmatpush1.bf16.msra.mxu0 %v636
        %653 = vmatprep.subr.bf16.mxu0 0
        %654 = vmatpush1.bf16.msra.mxu0 %v649
        %655 = vmatprep.subr.bf16.mxu0 0
        %656 = vmatpush1.bf16.msra.mxu0 0
        %657 = vmatprep.subr.bf16.mxu0 0
        %658 = vmatpush1.bf16.msra.mxu0 0
        %659 = vmatprep.subr.bf16.mxu0 0
        %660 = vmatpush1.bf16.msra.mxu0 0
        %661 = vmatprep.subr.bf16.mxu0 0
        %662 = vmatpush1.bf16.msra.mxu0 0
        %663 = vmatprep.subr.bf16.mxu0 0
        %664 = vmatpush1.bf16.msra.mxu0 0
        %665 = vmatprep.subr.bf16.mxu0 0
        %666 = vmatpush1.bf16.msra.mxu0 0
        %667 = vmatprep.subr.bf16.mxu0 0
        %668 = vmatpush1.bf16.msra.mxu0 0
        %669 = vmatprep.subr.bf16.mxu0 0
        %670 = vmatpush1.bf16.msra.mxu0 0
        %671 = vmatprep.subr.bf16.mxu0 0
        %672 = vmatpush1.bf16.msra.mxu0 0
        %673 = vmatprep.subr.bf16.mxu0 0
        %674 = vmatpush1.bf16.msra.mxu0 0
        %675 = vmatprep.subr.bf16.mxu0 0
        %676 = vmatpush1.bf16.msra.mxu0 0
        %677 = vmatprep.subr.bf16.mxu0 0
        %678 = vmatpush1.bf16.msra.mxu0 0
        %679 = vmatprep.subr.bf16.mxu0 0
        %680 = vmatpush1.bf16.msra.mxu0 0
        %681 = vmatprep.subr.bf16.mxu0 0
        %682 = vmatpush1.bf16.msra.mxu0 0
        %683 = vmatprep.mubr.bf16.mxu0 0
        %684 = vmatmul.mubr.bf16.gmra.mrb[0].mxu0 %v646
        %v685 = vpop.f32.mrb[0].mxu0
        %v686 = vadd.f32 %v642, %v685
        %v687 = vpop.f32.mrb[0].mxu0
        %v688 = vpop.f32.mrb[0].mxu0
        %v689 = vpop.f32.mrb[0].mxu0
        %690 = vdwg.mxu0
        %vm691 = vcmp.gt.f32.partialorder %v686, 0.0
        %v692 = vmul.f32 %v686, 0.2
        %v693 = vsel %vm691, %v686, %v692
        %v694 = vld [vmem:[%s9] sm:$0xf]
        %v695 = vpack.c.bf16 %v693, %v693
        %v696 = vld [vmem:[%s10] sm:$0xff]
        %698 = vset.pattern.permute.xlu0 0
        %699 = vperm.xlu0 %698, %v696
        %v700 = vpop.permute.xlu0 %699
        %v703 = vsel %vm563, %v694, 0
        %v706 = vsel %vm567, %v695, 0
        %708 = vmatprep.subr.bf16.mxu0 0
        %709 = vmatpush1.bf16.msra.mxu0 %v706
        %710 = vmatprep.subr.bf16.mxu0 0
        %711 = vmatpush1.bf16.msra.mxu0 0
        %712 = vmatprep.subr.bf16.mxu0 0
        %713 = vmatpush1.bf16.msra.mxu0 0
        %714 = vmatprep.subr.bf16.mxu0 0
        %715 = vmatpush1.bf16.msra.mxu0 0
        %716 = vmatprep.subr.bf16.mxu0 0
        %717 = vmatpush1.bf16.msra.mxu0 0
        %718 = vmatprep.subr.bf16.mxu0 0
        %719 = vmatpush1.bf16.msra.mxu0 0
        %720 = vmatprep.subr.bf16.mxu0 0
        %721 = vmatpush1.bf16.msra.mxu0 0
        %722 = vmatprep.subr.bf16.mxu0 0
        %723 = vmatpush1.bf16.msra.mxu0 0
        %724 = vmatprep.subr.bf16.mxu0 0
        %725 = vmatpush1.bf16.msra.mxu0 0
        %726 = vmatprep.subr.bf16.mxu0 0
        %727 = vmatpush1.bf16.msra.mxu0 0
        %728 = vmatprep.subr.bf16.mxu0 0
        %729 = vmatpush1.bf16.msra.mxu0 0
        %730 = vmatprep.subr.bf16.mxu0 0
        %731 = vmatpush1.bf16.msra.mxu0 0
        %732 = vmatprep.subr.bf16.mxu0 0
        %733 = vmatpush1.bf16.msra.mxu0 0
        %734 = vmatprep.subr.bf16.mxu0 0
        %735 = vmatpush1.bf16.msra.mxu0 0
        %736 = vmatprep.subr.bf16.mxu0 0
        %737 = vmatpush1.bf16.msra.mxu0 0
        %738 = vmatprep.subr.bf16.mxu0 0
        %739 = vmatpush1.bf16.msra.mxu0 0
        %740 = vmatprep.mubr.bf16.mxu0 0
        %741 = vmatmul.mubr.bf16.gmra.mrb[0].mxu0 %v703
        %v742 = vpop.f32.mrb[0].mxu0
        %v743 = vadd.f32 %v700, %v742
        %v744 = vpop.f32.mrb[0].mxu0
        %v745 = vpop.f32.mrb[0].mxu0
        %v746 = vpop.f32.mrb[0].mxu0
        %747 = vdwg.mxu0
        %v748 = vadd.f32 %v743, %v606
        %vm749 = vcmask 130048
        %750 = vst.msk [vmem:[%s497] sm:$0xff] %vm749, %v748
        %s751 = sand.u32 %s321, 1
        %s752 = scalar_lea.sflag [#allocation3], %s751
        %s753 = sand.u32 %s321, 1
        %s754 = smul.addr %s753, 8
        %s755 = scalar_lea.vmem [#allocation2], %s754
        // Predicated region
        $region65: #{residual_block.1} parent=63 // pred_check
          %p756 = pneg %p331
        $region66: #{residual_block.1} parent=63 // pred_check_branch
          %758 = sbr.rel (%p756) target = $region68
        $region67: #{residual_block.1} parent=63 // pred_region
          %s760 = ssub.s32 128, 128
          %761 = vsyncadd %s752, %s760
          %s762 = sadd.s32 %s30, %s29
          %s763 = smul.addr %s762, 128
          %s764 = scalar_lea.hbm %s11, %s763
          %s766 = sshll.u32 %s755, 4
          %s767 = int_to_ptr.vmem [resolvable:$true] %s766
          %769 = dma.vmem_to_hbm [thread:$0]  %s767, 128, %s764, %s752
        $region68: #{residual_block.1} parent=63 // pred_fallthru
          _
      $region64: #{residual_block.1} parent=5 // pred_fallthru
        _
      %p770 = scmp.le.s32.totalorder 2, %s20
      // Predicated region
      $region69: #{residual_block.1} parent=5 // pred_check
        %p771 = pneg %p770
      $region70: #{residual_block.1} parent=5 // pred_check_branch
        %773 = sbr.rel (%p771) target = $region72
      $region71: #{residual_block.1} parent=5 // pred_region
        %s774 = ssub.s32 %s20, 2
        // Predicated region
        $region73: #{residual_block.1} parent=71 // pred_check
          %p775 = pneg %p337
        $region74: #{residual_block.1} parent=71 // pred_check_branch
          %777 = sbr.rel (%p775) target = $region76
        $region75: #{residual_block.1} parent=71 // pred_region
          %s778 = sand.u32 %s322, 1
          %s779 = scalar_lea.sflag [#allocation3], %s778
          %s780 = sand.u32 %s322, 1
          %s781 = smul.addr %s780, 8
          %s782 = scalar_lea.vmem [#allocation2], %s781
          %783 = dma.done %s779, 128
        $region76: #{residual_block.1} parent=71 // pred_fallthru
          _
      $region72: #{residual_block.1} parent=5 // pred_fallthru
        _
    $region6: #{residual_block.1} parent=1 // loop_footer
      %s24 = sadd.s32 1, %s20
    $region7: #{residual_block.1} parent=1 // loop_footer_branch
      %19 = sbr.rel target = $region3
    $region8: #{residual_block.1} parent=1 // loop_exit
      _
    %784 = vsyncpa [#allocation3], 1
    %s785 = scalar_lea.sflag [#allocation3], 1
    %786 = vsyncpa %s785, 1

</llo_original>
